<compile_context>
chip_gen: v5e
topology: v5e:2x2
jax: 0.10.0
libtpu: 0.0.40
codegen_flags: <defaults>
</compile_context>

<pallas_src>
import functools

import jax
import jax.numpy as jnp
from jax import lax
from jax.experimental import pallas as pl
from jax.experimental.pallas import tpu as pltpu


# ---------------- Kernel A: QKV projection (row-tiled over N) ----------------
def qkv_proj_kernel(x_ref, w_ref, b_ref, qkv_ref):
    x = x_ref[0].astype(jnp.bfloat16)                    # (tm, D)
    w = w_ref[...].astype(jnp.bfloat16)                  # (D, 3D), VMEM-resident
    qkv_ref[0] = (
        jnp.dot(x, w, preferred_element_type=jnp.float32) + b_ref[...]
    )


# ------------- Kernel B: attention, grid over (batch, head, q-row tile) -------------
def attention_kernel(qkv_q_ref, qkv_kv_ref, score_ref, out_ref, *, head_dim):
    scale = float(head_dim) ** -0.5
    qkv_q = qkv_q_ref[0, 0]                              # (tq, 3*hd) f32
    qkv_kv = qkv_kv_ref[0, 0]                            # (N,  3*hd) f32

    # q/k/v are static column slices of the single qkv input (no split copies).
    q = qkv_q[:, 0:head_dim].astype(jnp.bfloat16)                    # (tq, hd)
    k = qkv_kv[:, head_dim:2 * head_dim].astype(jnp.bfloat16)        # (N, hd)
    v = qkv_kv[:, 2 * head_dim:3 * head_dim].astype(jnp.bfloat16)    # (N, hd)

    s = lax.dot_general(q, k, (((1,), (1,)), ((), ())),
                        preferred_element_type=jnp.float32) * scale  # (tq, N)
    s = s - jnp.max(s, axis=-1, keepdims=True)
    e = jnp.exp(s)
    p = e * pl.reciprocal(jnp.sum(e, axis=-1, keepdims=True), approx=True)

    score_ref[0, 0] = p                                              # (tq, N) f32
    out_ref[0, 0] = jnp.dot(p.astype(jnp.bfloat16), v,
                            preferred_element_type=jnp.float32)      # (tq, hd)


def _row_tile(n, preferred=256):
    # Pick a pipelineable row tile; fall back to the full (small) extent.
    return preferred if (n % preferred == 0) else n


# ---------------- wrapper ----------------
@functools.partial(jax.jit, static_argnames=("num_heads",))
def multi_head_attention(x, w_qkv, b_qkv, num_heads):
    """x: (B,N,D) f32; w_qkv: (D,3D) (torch weight transposed); b_qkv: (1,3D)."""
    B, N, D = x.shape
    H = num_heads
    head_dim = D // num_heads
    vmem_limit = 32 * 1024 * 1024   # fits v5e/v6e/v7x scoped VMEM; tiles are far smaller

    # ---- QKV projection: (B, N, D) @ (D, 3D) + b -> (B, N, 3D) ----
    tm = _row_tile(N)
    qkv = pl.pallas_call(
        qkv_proj_kernel,
        out_shape=jax.ShapeDtypeStruct((B, N, 3 * D), jnp.float32),
        grid=(B, N // tm),
        in_specs=[
            pl.BlockSpec((1, tm, D), lambda b, i: (b, i, 0)),
            pl.BlockSpec((D, 3 * D), lambda b, i: (0, 0)),
            pl.BlockSpec((1, 3 * D), lambda b, i: (0, 0)),
        ],
        out_specs=pl.BlockSpec((1, tm, 3 * D), lambda b, i: (b, i, 0)),
        compiler_params=pltpu.CompilerParams(
            dimension_semantics=("parallel", "parallel"),
            vmem_limit_bytes=vmem_limit),
        cost_estimate=pl.CostEstimate(
            flops=2 * B * N * D * 3 * D,
            transcendentals=0,
            bytes_accessed=4 * (B * N * D + D * 3 * D + 3 * D + B * N * 3 * D)),
    )(x, w_qkv, b_qkv)

    # torch's quirky reshape (B, N, 3D) -> (B, H, N, 3*head_dim): pure metadata in XLA.
    # The reshaped array is passed as ONE input (twice: q-row view and full-K/V view);
    # no jnp.split, so no extra materialized q/k/v copies in HBM.
    qkv_r = qkv.reshape(B, H, N, 3 * head_dim)

    tq = _row_tile(N)
    kernel = functools.partial(attention_kernel, head_dim=head_dim)
    score, out_heads = pl.pallas_call(
        kernel,
        out_shape=(
            jax.ShapeDtypeStruct((B, H, N, N), jnp.float32),
            jax.ShapeDtypeStruct((B, H, N, head_dim), jnp.float32),
        ),
        grid=(B, H, N // tq),
        in_specs=[
            pl.BlockSpec((1, 1, tq, 3 * head_dim), lambda b, h, i: (b, h, i, 0)),
            pl.BlockSpec((1, 1, N, 3 * head_dim), lambda b, h, i: (b, h, 0, 0)),
        ],
        out_specs=(
            pl.BlockSpec((1, 1, tq, N), lambda b, h, i: (b, h, i, 0)),
            pl.BlockSpec((1, 1, tq, head_dim), lambda b, h, i: (b, h, i, 0)),
        ),
        compiler_params=pltpu.CompilerParams(
            dimension_semantics=("parallel", "parallel", "parallel"),
            vmem_limit_bytes=vmem_limit),
        cost_estimate=pl.CostEstimate(
            flops=4 * B * H * N * N * head_dim,
            transcendentals=B * H * N * N,
            bytes_accessed=4 * (2 * B * H * N * 3 * head_dim
                                + B * H * N * N + B * H * N * head_dim)),
    )(qkv_r, qkv_r)

    # torch: out.permute(0, 2, 1, 3).reshape(b, n, d)
    out = out_heads.transpose(0, 2, 1, 3).reshape(B, N, D)
    return score, out


# ---------------- pure-JAX reference (f32) for correctness check ----------------
def reference_forward(x, w_qkv, b_qkv, num_heads):
    B, N, D = x.shape
    hd = D // num_heads
    qkv = x @ w_qkv + b_qkv
    q, k, v = jnp.split(qkv.reshape(B, num_heads, N, 3 * hd), 3, axis=-1)
    s = jax.nn.softmax(jnp.einsum("bhnd,bhmd->bhnm", q, k) * hd ** -0.5, axis=-1)
    o = jnp.einsum("bhnm,bhmd->bhnd", s, v)
    return s, o.transpose(0, 2, 1, 3).reshape(B, N, D)


if __name__ == "__main__":
    B, N, D, H = 2, 8, 32, 4

    key = jax.random.PRNGKey(0)
    kx, kw, kb = jax.random.split(key, 3)
    x = jax.random.normal(kx, (B, N, D), jnp.float32)
    # nn.Linear weight in PyTorch convention (out, in); transpose for kernel layout.
    w_qkv_pt = 0.05 * jax.random.normal(kw, (3 * D, D), jnp.float32)
    b_qkv = 0.05 * jax.random.normal(kb, (3 * D,), jnp.float32)

    w_qkv = w_qkv_pt.T               # (D, 3D)
    b_qkv2 = b_qkv.reshape(1, -1)    # (1, 3D)

    score, out = multi_head_attention(x, w_qkv, b_qkv2, num_heads=H)
    jax.block_until_ready((score, out))

    score_ref, out_ref = reference_forward(x, w_qkv, b_qkv2, H)
    assert score.shape == (B, H, N, N) and out.shape == (B, N, D)
    assert jnp.allclose(score, score_ref, rtol=2e-2, atol=2e-2), \
        float(jnp.max(jnp.abs(score - score_ref)))
    assert jnp.allclose(out, out_ref, rtol=2e-2, atol=2e-2), \
        float(jnp.max(jnp.abs(out - out_ref)))

    print("KERNEL_OK")
</pallas_src>

<mosaic_0001>
module attributes {stable_mosaic.version = 11 : i64} {
  func.func @qkv_proj_kernel(%arg0: i32, %arg1: i32, %arg2: memref<1x8x32xf32, #tpu.memory_space<vmem>>, %arg3: memref<32x96xf32, #tpu.memory_space<vmem>>, %arg4: memref<1x96xf32, #tpu.memory_space<vmem>>, %arg5: memref<1x8x96xf32, #tpu.memory_space<vmem>>) attributes {dimension_semantics = [#tpu.dimension_semantics<parallel>, #tpu.dimension_semantics<parallel>], iteration_bounds = array<i64: 2, 1>, scalar_prefetch = 0 : i64, scratch_operands = 0 : i64, tpu.core_type = #tpu.core_type<tc>, window_params = [{transform_indices = @transform_0, window_bounds = array<i64: 1, 8, 32>}, {pipeline_mode = #tpu.pipeline_mode<synchronous>, transform_indices = @transform_1, window_bounds = array<i64: 32, 96>}, {pipeline_mode = #tpu.pipeline_mode<synchronous>, transform_indices = @transform_2, window_bounds = array<i64: 1, 96>}, {transform_indices = @transform_3, window_bounds = array<i64: 1, 8, 96>}]} {
    %c0 = arith.constant 0 : index
    %c0_0 = arith.constant 0 : index
    %c0_1 = arith.constant 0 : index
    %0 = vector.load %arg2[%c0, %c0_0, %c0_1] : memref<1x8x32xf32, #tpu.memory_space<vmem>>, vector<1x8x32xf32>
    %1 = vector.shape_cast %0 : vector<1x8x32xf32> to vector<8x32xf32>
    %2 = arith.truncf %1 : vector<8x32xf32> to vector<8x32xbf16>
    %c0_2 = arith.constant 0 : index
    %c0_3 = arith.constant 0 : index
    %3 = vector.load %arg3[%c0_2, %c0_3] : memref<32x96xf32, #tpu.memory_space<vmem>>, vector<32x96xf32>
    %4 = arith.truncf %3 : vector<32x96xf32> to vector<32x96xbf16>
    %cst = arith.constant dense<0.000000e+00> : vector<8x96xf32>
    %5 = tpu.matmul %2, %4, %cst {dimension_numbers = #tpu.dot_dimension_numbers<[1], [0], [0], [1], [0, 0, 1, 1], [], []>} : vector<8x32xbf16>, vector<32x96xbf16>, vector<8x96xf32> -> vector<8x96xf32>
    %c0_4 = arith.constant 0 : index
    %c0_5 = arith.constant 0 : index
    %6 = vector.load %arg4[%c0_4, %c0_5] : memref<1x96xf32, #tpu.memory_space<vmem>>, vector<1x96xf32>
    %7 = vector.broadcast %6 : vector<1x96xf32> to vector<8x96xf32>
    %8 = arith.addf %5, %7 : vector<8x96xf32>
    %c0_6 = arith.constant 0 : index
    %c0_7 = arith.constant 0 : index
    %c0_8 = arith.constant 0 : index
    %9 = vector.load %arg5[%c0_6, %c0_7, %c0_8] : memref<1x8x96xf32, #tpu.memory_space<vmem>>, vector<1x8x96xf32>
    %10 = vector.shape_cast %9 : vector<1x8x96xf32> to vector<8x96xf32>
    %11 = vector.shape_cast %8 : vector<8x96xf32> to vector<1x8x96xf32>
    tpu.vector_store %arg5[%c0_6, %c0_7, %c0_8], %11 {strides = array<i32>} : memref<1x8x96xf32, #tpu.memory_space<vmem>>, vector<1x8x96xf32>,
    return
  }
  func.func @transform_0(%arg0: i32, %arg1: i32) -> (i32, i32, i32) {
    %c0_i32 = arith.constant 0 : i32
    %c0_i32_0 = arith.constant 0 : i32
    return %arg0, %arg1, %c0_i32 : i32, i32, i32
  }
  func.func @transform_1(%arg0: i32, %arg1: i32) -> (i32, i32) {
    %c0_i32 = arith.constant 0 : i32
    %c0_i32_0 = arith.constant 0 : i32
    %c0_i32_1 = arith.constant 0 : i32
    return %c0_i32, %c0_i32_0 : i32, i32
  }
  func.func @transform_2(%arg0: i32, %arg1: i32) -> (i32, i32) {
    %c0_i32 = arith.constant 0 : i32
    %c0_i32_0 = arith.constant 0 : i32
    %c0_i32_1 = arith.constant 0 : i32
    return %c0_i32, %c0_i32_0 : i32, i32
  }
  func.func @transform_3(%arg0: i32, %arg1: i32) -> (i32, i32, i32) {
    %c0_i32 = arith.constant 0 : i32
    %c0_i32_0 = arith.constant 0 : i32
    return %arg0, %arg1, %c0_i32 : i32, i32, i32
  }
}

module attributes {stable_mosaic.version = 11 : i64} {
  func.func @attention_kernel(%arg0: i32, %arg1: i32, %arg2: i32, %arg3: memref<1x1x8x24xf32, #tpu.memory_space<vmem>>, %arg4: memref<1x1x8x24xf32, #tpu.memory_space<vmem>>, %arg5: memref<1x1x8x8xf32, #tpu.memory_space<vmem>>, %arg6: memref<1x1x8x8xf32, #tpu.memory_space<vmem>>) attributes {dimension_semantics = [#tpu.dimension_semantics<parallel>, #tpu.dimension_semantics<parallel>, #tpu.dimension_semantics<parallel>], iteration_bounds = array<i64: 2, 4, 1>, scalar_prefetch = 0 : i64, scratch_operands = 0 : i64, tpu.core_type = #tpu.core_type<tc>, window_params = [{transform_indices = @transform_0, window_bounds = array<i64: 1, 1, 8, 24>}, {transform_indices = @transform_1, window_bounds = array<i64: 1, 1, 8, 24>}, {transform_indices = @transform_2, window_bounds = array<i64: 1, 1, 8, 8>}, {transform_indices = @transform_3, window_bounds = array<i64: 1, 1, 8, 8>}]} {
    %c0 = arith.constant 0 : index
    %c0_0 = arith.constant 0 : index
    %c0_1 = arith.constant 0 : index
    %c0_2 = arith.constant 0 : index
    %0 = vector.load %arg3[%c0, %c0_0, %c0_1, %c0_2] : memref<1x1x8x24xf32, #tpu.memory_space<vmem>>, vector<1x1x8x24xf32>
    %1 = vector.shape_cast %0 : vector<1x1x8x24xf32> to vector<8x24xf32>
    %c0_3 = arith.constant 0 : index
    %c0_4 = arith.constant 0 : index
    %c0_5 = arith.constant 0 : index
    %c0_6 = arith.constant 0 : index
    %2 = vector.load %arg4[%c0_3, %c0_4, %c0_5, %c0_6] : memref<1x1x8x24xf32, #tpu.memory_space<vmem>>, vector<1x1x8x24xf32>
    %3 = vector.shape_cast %2 : vector<1x1x8x24xf32> to vector<8x24xf32>
    %4 = vector.extract_strided_slice %1 {offsets = [0, 0], sizes = [8, 8], strides = [1, 1]} : vector<8x24xf32> to vector<8x8xf32>
    %5 = arith.truncf %4 : vector<8x8xf32> to vector<8x8xbf16>
    %6 = vector.extract_strided_slice %3 {offsets = [0, 8], sizes = [8, 8], strides = [1, 1]} : vector<8x24xf32> to vector<8x8xf32>
    %7 = arith.truncf %6 : vector<8x8xf32> to vector<8x8xbf16>
    %8 = vector.extract_strided_slice %3 {offsets = [0, 16], sizes = [8, 8], strides = [1, 1]} : vector<8x24xf32> to vector<8x8xf32>
    %9 = arith.truncf %8 : vector<8x8xf32> to vector<8x8xbf16>
    %cst = arith.constant dense<0.000000e+00> : vector<8x8xf32>
    %10 = tpu.matmul %5, %7, %cst {dimension_numbers = #tpu.dot_dimension_numbers<[1], [1], [0], [0], [0, 0, 1, 0], [], []>} : vector<8x8xbf16>, vector<8x8xbf16>, vector<8x8xf32> -> vector<8x8xf32>
    %cst_7 = arith.constant 0.353553385 : f32
    %11 = vector.broadcast %cst_7 : f32 to vector<8x8xf32>
    %12 = arith.mulf %10, %11 : vector<8x8xf32>
    %cst_8 = arith.constant dense<0xFF800000> : vector<8xf32>
    %13 = vector.multi_reduction <maximumf>, %12, %cst_8 [1] : vector<8x8xf32> to vector<8xf32>
    %14 = vector.shape_cast %13 : vector<8xf32> to vector<8x1xf32>
    %15 = vector.broadcast %14 : vector<8x1xf32> to vector<8x8xf32>
    %16 = arith.subf %12, %15 : vector<8x8xf32>
    %17 = math.exp %16 : vector<8x8xf32>
    %cst_9 = arith.constant dense<0.000000e+00> : vector<8xf32>
    %18 = vector.multi_reduction <add>, %17, %cst_9 [1] : vector<8x8xf32> to vector<8xf32>
    %19 = vector.shape_cast %18 : vector<8xf32> to vector<8x1xf32>
    %20 = tpu.reciprocal %19 {approx = true} : vector<8x1xf32> -> vector<8x1xf32>
    %21 = vector.broadcast %20 : vector<8x1xf32> to vector<8x8xf32>
    %22 = arith.mulf %17, %21 : vector<8x8xf32>
    %c0_10 = arith.constant 0 : index
    %c0_11 = arith.constant 0 : index
    %c0_12 = arith.constant 0 : index
    %c0_13 = arith.constant 0 : index
    %23 = vector.load %arg5[%c0_10, %c0_11, %c0_12, %c0_13] : memref<1x1x8x8xf32, #tpu.memory_space<vmem>>, vector<1x1x8x8xf32>
    %24 = vector.shape_cast %23 : vector<1x1x8x8xf32> to vector<8x8xf32>
    %25 = vector.shape_cast %22 : vector<8x8xf32> to vector<1x1x8x8xf32>
    tpu.vector_store %arg5[%c0_10, %c0_11, %c0_12, %c0_13], %25 {strides = array<i32>} : memref<1x1x8x8xf32, #tpu.memory_space<vmem>>, vector<1x1x8x8xf32>,
    %26 = arith.truncf %22 : vector<8x8xf32> to vector<8x8xbf16>
    %cst_14 = arith.constant dense<0.000000e+00> : vector<8x8xf32>
    %27 = tpu.matmul %26, %9, %cst_14 {dimension_numbers = #tpu.dot_dimension_numbers<[1], [0], [0], [1], [0, 0, 1, 1], [], []>} : vector<8x8xbf16>, vector<8x8xbf16>, vector<8x8xf32> -> vector<8x8xf32>
    %c0_15 = arith.constant 0 : index
    %c0_16 = arith.constant 0 : index
    %c0_17 = arith.constant 0 : index
    %c0_18 = arith.constant 0 : index
    %28 = vector.load %arg6[%c0_15, %c0_16, %c0_17, %c0_18] : memref<1x1x8x8xf32, #tpu.memory_space<vmem>>, vector<1x1x8x8xf32>
    %29 = vector.shape_cast %28 : vector<1x1x8x8xf32> to vector<8x8xf32>
    %30 = vector.shape_cast %27 : vector<8x8xf32> to vector<1x1x8x8xf32>
    tpu.vector_store %arg6[%c0_15, %c0_16, %c0_17, %c0_18], %30 {strides = array<i32>} : memref<1x1x8x8xf32, #tpu.memory_space<vmem>>, vector<1x1x8x8xf32>,
    return
  }
  func.func @transform_0(%arg0: i32, %arg1: i32, %arg2: i32) -> (i32, i32, i32, i32) {
    %c0_i32 = arith.constant 0 : i32
    %c0_i32_0 = arith.constant 0 : i32
    return %arg0, %arg1, %arg2, %c0_i32 : i32, i32, i32, i32
  }
  func.func @transform_1(%arg0: i32, %arg1: i32, %arg2: i32) -> (i32, i32, i32, i32) {
    %c0_i32 = arith.constant 0 : i32
    %c0_i32_0 = arith.constant 0 : i32
    %c0_i32_1 = arith.constant 0 : i32
    return %arg0, %arg1, %c0_i32, %c0_i32_0 : i32, i32, i32, i32
  }
  func.func @transform_2(%arg0: i32, %arg1: i32, %arg2: i32) -> (i32, i32, i32, i32) {
    %c0_i32 = arith.constant 0 : i32
    %c0_i32_0 = arith.constant 0 : i32
    return %arg0, %arg1, %arg2, %c0_i32 : i32, i32, i32, i32
  }
  func.func @transform_3(%arg0: i32, %arg1: i32, %arg2: i32) -> (i32, i32, i32, i32) {
    %c0_i32 = arith.constant 0 : i32
    %c0_i32_0 = arith.constant 0 : i32
    return %arg0, %arg1, %arg2, %c0_i32 : i32, i32, i32, i32
  }
}

</mosaic_0001>

<llo_original>
// kernel: multi_head_attention.3
$region0: #{multi_head_attention.3}
  #allocation0 [shape = 'u32[]', space=smem, size = 0x4, offset = 0x4, fixed_abs, tag = 'smem constant byte address 0x4 - core index']
  #allocation1 [shape = 'u32[72,128]{1,0:T(1,128)}', space=vmem, size = 0x9000, scoped, tag = 'internal scratch']
  %s0 = inlined_call_operand.vmem [shape: f32[2,4,8,24], index: 0, kind: input, shape index: {}, may-alias: {0,1}]
  %s1 = inlined_call_operand.vmem [shape: f32[2,4,8,24], index: 1, kind: input, shape index: {}, may-alias: {0,1}]
  %s2 = inlined_call_operand.hbm [shape: f32[2,4,8,8], index: 2, kind: output, shape index: {0}]
  %s3 = inlined_call_operand.vmem [shape: f32[2,4,8,8], index: 3, kind: output, shape index: {1}]
  %4 = xla_tuple %s2, %s3
  %s5 = sld [smem:[#allocation0]]
  $region49: #{multi_head_attention.3} parent=0
    _
  %s7 = ssub.s32 1, %s5
  %s8 = scalar_select 0, %s7, %s5
  $region1: #{multi_head_attention.3} parent=0
    #allocation2 [shape = 'u8[8192]{0}', space=vmem, size = 0x2000, scoped, tag = 'output window, operand 0']
    #allocation3 [shape = 's32[2]{0}', space=sflag, size = 0x8, scoped, tag = 'scoped memory for multi_head_attention.3']
    %9 = vsyncpa [#allocation3], 0
    %s10 = scalar_lea.sflag [#allocation3], 1
    %11 = vsyncpa %s10, 0
    loop: start=0, step=1, limit=10
    $region2: #{multi_head_attention.3} parent=1 // loop_pre_header
      _
    $region3: #{multi_head_attention.3} parent=1 // loop_header
      %s13 = sphi 0, %s17
      %p14 = scmp.ge.s32.totalorder %s13, 10
      %s20 = sphi 0, %s39
      %s21 = sphi 0, %s35
      %s22 = sphi 0, %s31
      %s23 = sphi 0, %s20
      %s24 = sphi 0, %s21
      %s25 = sphi 0, %s22
      %s26 = sphi 0, %s23
      %s27 = sphi 0, %s24
      %s28 = sphi 0, %s25
      %s46 = sphi 0, %s48
      %s49 = sphi 0, %s46
      %s50 = sphi 0, %s49
      %s66 = sphi 0, %s50
      %s74 = sphi 0, %s76
      %s77 = sphi 0, %s74
      %s78 = sphi 0, %s77
      %s94 = sphi 0, %s78
      %s104 = sphi 0, %s106
      %s107 = sphi 0, %s104
      %s108 = sphi 0, %s107
      %s124 = sphi 0, %s108
      %s134 = sphi 0, %s136
      %s137 = sphi 0, %s134
      %s138 = sphi 0, %s137
      %s154 = sphi 0, %s138
    $region4: #{multi_head_attention.3} parent=1 // loop_header_branch
      %16 = sbr.rel (%p14) target = $region8
    $region5: #{multi_head_attention.3} parent=1 // loop_body
      %s18 = ssub.s32 %s13, 1
      %s19 = ssub.s32 %s13, 2
      %s29 = sadd.s32 1, %s22
      %p30 = scmp.ge.s32.totalorder %s29, 1
      %s31 = scalar_select %p30, 0, %s29
      %s32 = sadd.s32 1, %s21
      %s33 = scalar_select %p30, %s32, %s21
      %p34 = scmp.ge.s32.totalorder %s33, 4
      %s35 = scalar_select %p34, 0, %s33
      %s36 = sadd.s32 1, %s20
      %s37 = scalar_select %p34, %s36, %s20
      %p38 = scmp.ge.s32.totalorder %s37, 2
      %s39 = scalar_select %p38, 0, %s37
      %s40 = ssub.s32 %s20, %s39
      %s41 = ssub.s32 %s21, %s35
      %s42 = sor.u32 %s40, %s41
      %s43 = ssub.s32 %s22, %s31
      %s44 = sor.u32 %s42, %s43
      %p45 = scmp.eq.s32.totalorder %s44, 0
      %s47 = sadd.s32 %s46, 1
      %s48 = scalar_select %p45, %s46, %s47
      %p51 = pneg %p45
      %p52 = scmp.eq.s32.totalorder %s13, 7
      %p53 = por %p51, %p52
      %p54 = scmp.ne.s32.totalorder %s46, %s49
      %p55 = scmp.eq.s32.totalorder %s13, 0
      %p56 = por %p54, %p55
      %p57 = scmp.ne.s32.totalorder %s46, %s49
      %p58 = scmp.eq.s32.totalorder %s18, 7
      %p59 = por %p57, %p58
      %p60 = scmp.ne.s32.totalorder %s49, %s50
      %p61 = scmp.eq.s32.totalorder %s18, 0
      %p62 = por %p60, %p61
      %p63 = scmp.ne.s32.totalorder %s49, %s50
      %p64 = scmp.eq.s32.totalorder %s19, 7
      %p65 = por %p63, %p64
      %p67 = scmp.ne.s32.totalorder %s50, %s66
      %p68 = scmp.eq.s32.totalorder %s19, 0
      %p69 = por %p67, %p68
      %s70 = ssub.s32 %s20, %s39
      %s71 = ssub.s32 %s21, %s35
      %s72 = sor.u32 %s70, %s71
      %p73 = scmp.eq.s32.totalorder %s72, 0
      %s75 = sadd.s32 %s74, 1
      %s76 = scalar_select %p73, %s74, %s75
      %p79 = pneg %p73
      %p80 = scmp.eq.s32.totalorder %s13, 7
      %p81 = por %p79, %p80
      %p82 = scmp.ne.s32.totalorder %s74, %s77
      %p83 = scmp.eq.s32.totalorder %s13, 0
      %p84 = por %p82, %p83
      %p85 = scmp.ne.s32.totalorder %s74, %s77
      %p86 = scmp.eq.s32.totalorder %s18, 7
      %p87 = por %p85, %p86
      %p88 = scmp.ne.s32.totalorder %s77, %s78
      %p89 = scmp.eq.s32.totalorder %s18, 0
      %p90 = por %p88, %p89
      %p91 = scmp.ne.s32.totalorder %s77, %s78
      %p92 = scmp.eq.s32.totalorder %s19, 7
      %p93 = por %p91, %p92
      %p95 = scmp.ne.s32.totalorder %s78, %s94
      %p96 = scmp.eq.s32.totalorder %s19, 0
      %p97 = por %p95, %p96
      %s98 = ssub.s32 %s20, %s39
      %s99 = ssub.s32 %s21, %s35
      %s100 = sor.u32 %s98, %s99
      %s101 = ssub.s32 %s22, %s31
      %s102 = sor.u32 %s100, %s101
      %p103 = scmp.eq.s32.totalorder %s102, 0
      %s105 = sadd.s32 %s104, 1
      %s106 = scalar_select %p103, %s104, %s105
      %p109 = pneg %p103
      %p110 = scmp.eq.s32.totalorder %s13, 7
      %p111 = por %p109, %p110
      %p112 = scmp.ne.s32.totalorder %s104, %s107
      %p113 = scmp.eq.s32.totalorder %s13, 0
      %p114 = por %p112, %p113
      %p115 = scmp.ne.s32.totalorder %s104, %s107
      %p116 = scmp.eq.s32.totalorder %s18, 7
      %p117 = por %p115, %p116
      %p118 = scmp.ne.s32.totalorder %s107, %s108
      %p119 = scmp.eq.s32.totalorder %s18, 0
      %p120 = por %p118, %p119
      %p121 = scmp.ne.s32.totalorder %s107, %s108
      %p122 = scmp.eq.s32.totalorder %s19, 7
      %p123 = por %p121, %p122
      %p125 = scmp.ne.s32.totalorder %s108, %s124
      %p126 = scmp.eq.s32.totalorder %s19, 0
      %p127 = por %p125, %p126
      %s128 = ssub.s32 %s20, %s39
      %s129 = ssub.s32 %s21, %s35
      %s130 = sor.u32 %s128, %s129
      %s131 = ssub.s32 %s22, %s31
      %s132 = sor.u32 %s130, %s131
      %p133 = scmp.eq.s32.totalorder %s132, 0
      %s135 = sadd.s32 %s134, 1
      %s136 = scalar_select %p133, %s134, %s135
      %p139 = pneg %p133
      %p140 = scmp.eq.s32.totalorder %s13, 7
      %p141 = por %p139, %p140
      %p142 = scmp.ne.s32.totalorder %s134, %s137
      %p143 = scmp.eq.s32.totalorder %s13, 0
      %p144 = por %p142, %p143
      %p145 = scmp.ne.s32.totalorder %s134, %s137
      %p146 = scmp.eq.s32.totalorder %s18, 7
      %p147 = por %p145, %p146
      %p148 = scmp.ne.s32.totalorder %s137, %s138
      %p149 = scmp.eq.s32.totalorder %s18, 0
      %p150 = por %p148, %p149
      %p151 = scmp.ne.s32.totalorder %s137, %s138
      %p152 = scmp.eq.s32.totalorder %s19, 7
      %p153 = por %p151, %p152
      %p155 = scmp.ne.s32.totalorder %s138, %s154
      %p156 = scmp.eq.s32.totalorder %s19, 0
      %p157 = por %p155, %p156
      %p158 = scmp.le.s32.totalorder 1, %s13
      %p159 = scmp.lt.s32.totalorder %s13, 9
      %p160 = pnand %p158, %p159
      %p161 = pneg %p160
      // Predicated region
      $region9: #{multi_head_attention.3} parent=5 // pred_check
        _
      $region10: #{multi_head_attention.3} parent=5 // pred_check_branch
        %163 = sbr.rel (%p160) target = $region12
      $region11: #{multi_head_attention.3} parent=5 // pred_region
        %s164 = ssub.s32 %s13, 1
      $region12: #{multi_head_attention.3} parent=5 // pred_fallthru
        _
      %p165 = scmp.lt.s32.totalorder %s13, 8
      // Predicated region
      $region13: #{multi_head_attention.3} parent=5 // pred_check
        %p166 = pneg %p165
      $region14: #{multi_head_attention.3} parent=5 // pred_check_branch
        %168 = sbr.rel (%p166) target = $region16
      $region15: #{multi_head_attention.3} parent=5 // pred_region
        // Predicated region
        $region17: #{multi_head_attention.3} parent=15 // pred_check
          %p169 = pneg %p56
        $region18: #{multi_head_attention.3} parent=15 // pred_check_branch
          %171 = sbr.rel (%p169) target = $region20
        $region19: #{multi_head_attention.3} parent=15 // pred_region
          %p172 = scmp.lt.s32.totalorder %s20, 1
          %s173 = scalar_select %p172, %s20, 1
          %p174 = scmp.lt.s32.totalorder %s21, 3
          %s175 = scalar_select %p174, %s21, 3
          %p176 = scmp.lt.s32.totalorder %s22, 0
          %s177 = scalar_select %p176, %s22, 0
          %s178 = sadd.s32 %s177, %s175
          %s179 = smul.addr %s173, 4
          %s180 = sadd.s32 %s178, %s179
          %s181 = smul.addr %s180, 8
          %s182 = scalar_lea.vmem %s0, %s181
        $region20: #{multi_head_attention.3} parent=15 // pred_fallthru
          _
        // Predicated region
        $region21: #{multi_head_attention.3} parent=15 // pred_check
          %p183 = pneg %p84
        $region22: #{multi_head_attention.3} parent=15 // pred_check_branch
          %185 = sbr.rel (%p183) target = $region24
        $region23: #{multi_head_attention.3} parent=15 // pred_region
          %p186 = scmp.lt.s32.totalorder %s20, 1
          %s187 = scalar_select %p186, %s20, 1
          %p188 = scmp.lt.s32.totalorder %s21, 3
          %s189 = scalar_select %p188, %s21, 3
          %s190 = smul.addr %s187, 4
          %s191 = sadd.s32 %s189, %s190
          %s192 = smul.addr %s191, 8
          %s193 = scalar_lea.vmem %s1, %s192
        $region24: #{multi_head_attention.3} parent=15 // pred_fallthru
          _
      $region16: #{multi_head_attention.3} parent=5 // pred_fallthru
        _
      %p194 = scmp.le.s32.totalorder 1, %s13
      %p195 = scmp.lt.s32.totalorder %s13, 9
      %p196 = pnand %p194, %p195
      %p197 = pneg %p196
      // Predicated region
      $region25: #{multi_head_attention.3} parent=5 // pred_check
        _
      $region26: #{multi_head_attention.3} parent=5 // pred_check_branch
        %199 = sbr.rel (%p196) target = $region28
      $region27: #{multi_head_attention.3} parent=5 // pred_region
        %s200 = ssub.s32 %s13, 1
        %p201 = scmp.lt.s32.totalorder %s23, 1
        %s202 = scalar_select %p201, %s23, 1
        %p203 = scmp.lt.s32.totalorder %s24, 3
        %s204 = scalar_select %p203, %s24, 3
        %p205 = scmp.lt.s32.totalorder %s25, 0
        %s206 = scalar_select %p205, %s25, 0
        %s207 = sadd.s32 %s206, %s204
        %s208 = smul.addr %s202, 4
        %s209 = sadd.s32 %s207, %s208
        %s210 = smul.addr %s209, 8
        %s211 = scalar_lea.vmem %s0, %s210
        %p212 = pneg %p62
        %p213 = pneg %p59
        %p214 = scmp.lt.s32.totalorder %s23, 1
        %s215 = scalar_select %p214, %s23, 1
        %p216 = scmp.lt.s32.totalorder %s24, 3
        %s217 = scalar_select %p216, %s24, 3
        %s218 = smul.addr %s215, 4
        %s219 = sadd.s32 %s217, %s218
        %s220 = smul.addr %s219, 8
        %s221 = scalar_lea.vmem %s1, %s220
        %p222 = pneg %p90
        %p223 = pneg %p87
        %p224 = pneg %p120
        %p225 = pneg %p117
        %s226 = sand.u32 %s107, 1
        %s227 = scalar_lea.sflag [#allocation3], %s226
        %s228 = sand.u32 %s107, 1
        %s229 = smul.addr %s228, 8
        %s230 = scalar_lea.vmem [#allocation2], %s229
        %p231 = pneg %p150
        %p232 = pneg %p147
        %p233 = scmp.lt.s32.totalorder %s23, 1
        %s234 = scalar_select %p233, %s23, 1
        %p235 = scmp.lt.s32.totalorder %s24, 3
        %s236 = scalar_select %p235, %s24, 3
        %p237 = scmp.lt.s32.totalorder %s25, 0
        %s238 = scalar_select %p237, %s25, 0
        %s239 = sadd.s32 %s238, %s236
        %s240 = smul.addr %s234, 4
        %s241 = sadd.s32 %s239, %s240
        %s242 = smul.addr %s241, 8
        %s243 = scalar_lea.vmem %s3, %s242
        %p244 = scmp.lt.s32.totalorder %s23, 1
        %s245 = scalar_select %p244, %s23, 1
        %p246 = scmp.lt.s32.totalorder %s24, 3
        %s247 = scalar_select %p246, %s24, 3
        %p248 = scmp.lt.s32.totalorder %s25, 0
        %s249 = scalar_select %p248, %s25, 0
        %s250 = sadd.s32 %s249, %s247
        %s251 = smul.addr %s245, 4
        %s252 = sadd.s32 %s250, %s251
        %s253 = smul.addr %s252, 8
        %s254 = scalar_lea.vmem %s0, %s253
        %p255 = scmp.lt.s32.totalorder %s23, 1
        %s256 = scalar_select %p255, %s23, 1
        %p257 = scmp.lt.s32.totalorder %s24, 3
        %s258 = scalar_select %p257, %s24, 3
        %s259 = smul.addr %s256, 4
        %s260 = sadd.s32 %s258, %s259
        %s261 = smul.addr %s260, 8
        %s262 = scalar_lea.vmem %s1, %s261
        %p263 = scmp.lt.s32.totalorder %s23, 1
        %s264 = scalar_select %p263, %s23, 1
        %p265 = scmp.lt.s32.totalorder %s24, 3
        %s266 = scalar_select %p265, %s24, 3
        %p267 = scmp.lt.s32.totalorder %s25, 0
        %s268 = scalar_select %p267, %s25, 0
        %s269 = sadd.s32 %s268, %s266
        %s270 = smul.addr %s264, 4
        %s271 = sadd.s32 %s269, %s270
        %s272 = smul.addr %s271, 8
        %s273 = scalar_lea.vmem %s3, %s272
        %v275 = vld [vmem:[%s254] sm:$0xff]
        %v276 = vld [vmem:[%s262] sm:$0xff]
        %v277 = vpack.c.bf16 %v275, %v275
        %v278 = vpack.c.bf16 %v276, %v276
        %280 = vrot.lane.b32.xlu0 %v278, 120
        %v281 = vpop.permute.xlu0 %280
        %vm282 = vcmask 64512
        %v284 = vsel %vm282, %v277, 0
        %v287 = vsel %vm282, %v281, 0
        %289 = vmatpush.bf16.xpose.msra.mxu0 0
        %290 = vmatpush.bf16.xpose.msra.mxu0 0
        %291 = vmatpush.bf16.xpose.msra.mxu0 0
        %292 = vmatpush.bf16.xpose.msra.mxu0 0
        %293 = vmatpush.bf16.xpose.msra.mxu0 0
        %294 = vmatpush.bf16.xpose.msra.mxu0 0
        %295 = vmatpush.bf16.xpose.msra.mxu0 0
        %296 = vmatpush.bf16.xpose.msra.mxu0 %v287
        %297 = vmatmul.bf16.gmra.mxu0 %v284
        %v298 = vpop.f32.mrf.mxu0
        %v299 = vadd.f32 0.0, %v298
        %v300 = vpop.f32.mrf.mxu0
        %301 = vdwg.mxu0
        %v302 = vmul.f32 %v299, 0.35355338
        %v303 = vsel %vm282, %v302, -inf
        %304 = vmax.xlane.f32.xlu0 %v303
        %v305 = vpop.xlane.xlu0 %304
        %v306 = vsub.f32 %v302, %v305
        %v307 = vmul.f32 %v306, 1.442695
        %v308 = vpow.pop %v307
        %v309 = vsel %vm282, %v308, 0.0
        %310 = vadd.xlane.f32.xlu0 %v309
        %v311 = vpop.xlane.xlu0 %310
        %v312 = vrcp.pop %v311
        %v313 = vmul.f32 %v308, %v312
        %314 = vst.msk [vmem:[%s230] sm:$0xff] %vm282, %v313
        %v315 = vpack.c.bf16 %v313, %v313
        %316 = vrot.lane.b32.xlu0 %v278, 112
        %v317 = vpop.permute.xlu0 %316
        %v319 = vsel %vm282, %v315, 0
        %vm321 = vcmask 1043456
        %v323 = vsel %vm321, %v317, 0
        %325 = vmatpush.bf16.msra.mxu0 0
        %326 = vmatpush.bf16.msra.mxu0 0
        %327 = vmatpush.bf16.msra.mxu0 0
        %328 = vmatpush.bf16.msra.mxu0 0
        %329 = vmatpush.bf16.msra.mxu0 0
        %330 = vmatpush.bf16.msra.mxu0 0
        %331 = vmatpush.bf16.msra.mxu0 0
        %332 = vmatpush.bf16.msra.mxu0 %v323
        %333 = vmatmul.bf16.gmra.mxu0 %v319
        %v334 = vpop.f32.mrf.mxu0
        %v335 = vadd.f32 0.0, %v334
        %v336 = vpop.f32.mrf.mxu0
        %337 = vdwg.mxu0
        %338 = vst.msk [vmem:[%s273] sm:$0xff] %vm282, %v335
        %s339 = sand.u32 %s107, 1
        %s340 = scalar_lea.sflag [#allocation3], %s339
        %s341 = sand.u32 %s107, 1
        %s342 = smul.addr %s341, 8
        %s343 = scalar_lea.vmem [#allocation2], %s342
        %p344 = scmp.lt.s32.totalorder %s23, 1
        %s345 = scalar_select %p344, %s23, 1
        %p346 = scmp.lt.s32.totalorder %s24, 3
        %s347 = scalar_select %p346, %s24, 3
        %p348 = scmp.lt.s32.totalorder %s25, 0
        %s349 = scalar_select %p348, %s25, 0
        %s350 = sadd.s32 %s349, %s347
        %s351 = smul.addr %s345, 4
        %s352 = sadd.s32 %s350, %s351
        %s353 = smul.addr %s352, 8
        %s354 = scalar_lea.vmem %s3, %s353
        // Predicated region
        $region29: #{multi_head_attention.3} parent=27 // pred_check
          %p355 = pneg %p117
        $region30: #{multi_head_attention.3} parent=27 // pred_check_branch
          %357 = sbr.rel (%p355) target = $region32
        $region31: #{multi_head_attention.3} parent=27 // pred_region
          %359 = vsyncadd %s340, 0
          %s360 = sadd.s32 %s25, %s24
          %s361 = smul.addr %s23, 4
          %s362 = sadd.s32 %s360, %s361
          %s363 = smul.addr %s362, 8
          %s364 = scalar_lea.hbm %s2, %s363
          %s366 = sshll.u32 %s343, 4
          %s367 = int_to_ptr.vmem [resolvable:$true] %s366
          %s368 = sshll.u32 %s364, 4
          %s369 = int_to_ptr.hbm [resolvable:$true] %s368
          %371 = dma.vmem_to_hbm [thread:$0]  %s367, 128, %s369, %s340
        $region32: #{multi_head_attention.3} parent=27 // pred_fallthru
          _
        // Predicated region
        $region33: #{multi_head_attention.3} parent=27 // pred_check
          %p372 = pneg %p147
        $region34: #{multi_head_attention.3} parent=27 // pred_check_branch
          %374 = sbr.rel (%p372) target = $region36
        $region35: #{multi_head_attention.3} parent=27 // pred_region
          _
        $region36: #{multi_head_attention.3} parent=27 // pred_fallthru
          _
      $region28: #{multi_head_attention.3} parent=5 // pred_fallthru
        _
      %p375 = scmp.le.s32.totalorder 2, %s13
      // Predicated region
      $region37: #{multi_head_attention.3} parent=5 // pred_check
        %p376 = pneg %p375
      $region38: #{multi_head_attention.3} parent=5 // pred_check_branch
        %378 = sbr.rel (%p376) target = $region40
      $region39: #{multi_head_attention.3} parent=5 // pred_region
        %s379 = ssub.s32 %s13, 2
        // Predicated region
        $region41: #{multi_head_attention.3} parent=39 // pred_check
          %p380 = pneg %p123
        $region42: #{multi_head_attention.3} parent=39 // pred_check_branch
          %382 = sbr.rel (%p380) target = $region44
        $region43: #{multi_head_attention.3} parent=39 // pred_region
          %s383 = sand.u32 %s108, 1
          %s384 = scalar_lea.sflag [#allocation3], %s383
          %s385 = sand.u32 %s108, 1
          %s386 = smul.addr %s385, 8
          %s387 = scalar_lea.vmem [#allocation2], %s386
          %389 = dma.done %s384, 128
        $region44: #{multi_head_attention.3} parent=39 // pred_fallthru
          _
        // Predicated region
        $region45: #{multi_head_attention.3} parent=39 // pred_check
          %p390 = pneg %p153
        $region46: #{multi_head_attention.3} parent=39 // pred_check_branch
          %392 = sbr.rel (%p390) target = $region48
        $region47: #{multi_head_attention.3} parent=39 // pred_region
          %p393 = scmp.lt.s32.totalorder %s26, 1
          %s394 = scalar_select %p393, %s26, 1
          %p395 = scmp.lt.s32.totalorder %s27, 3
          %s396 = scalar_select %p395, %s27, 3
          %p397 = scmp.lt.s32.totalorder %s28, 0
          %s398 = scalar_select %p397, %s28, 0
          %s399 = sadd.s32 %s398, %s396
          %s400 = smul.addr %s394, 4
          %s401 = sadd.s32 %s399, %s400
          %s402 = smul.addr %s401, 8
          %s403 = scalar_lea.vmem %s3, %s402
        $region48: #{multi_head_attention.3} parent=39 // pred_fallthru
          _
      $region40: #{multi_head_attention.3} parent=5 // pred_fallthru
        _
    $region6: #{multi_head_attention.3} parent=1 // loop_footer
      %s17 = sadd.s32 1, %s13
    $region7: #{multi_head_attention.3} parent=1 // loop_footer_branch
      %12 = sbr.rel target = $region3
    $region8: #{multi_head_attention.3} parent=1 // loop_exit
      _
    %404 = vsyncpa [#allocation3], 1
    %s405 = scalar_lea.sflag [#allocation3], 1
    %406 = vsyncpa %s405, 1

// kernel: multi_head_attention.2
$region0: #{multi_head_attention.2}
  #allocation0 [shape = 'u32[]', space=smem, size = 0x4, offset = 0x4, fixed_abs, tag = 'smem constant byte address 0x4 - core index']
  #allocation1 [shape = 'u32[72,128]{1,0:T(1,128)}', space=vmem, size = 0x9000, scoped, tag = 'internal scratch']
  %s0 = inlined_call_operand.hbm [shape: f32[2,8,32], index: 0, kind: input, shape index: {}]
  %s1 = inlined_call_operand.hbm [shape: f32[32,96], index: 1, kind: input, shape index: {}]
  %s2 = inlined_call_operand.vmem [shape: f32[1,96], index: 2, kind: input, shape index: {}]
  %s3 = inlined_call_operand.vmem [shape: f32[2,8,96], index: 3, kind: output, shape index: {}]
  %s4 = sld [smem:[#allocation0]]
  $region53: #{multi_head_attention.2} parent=0
    _
  %s6 = ssub.s32 1, %s4
  %s7 = scalar_select 0, %s6, %s4
  $region1: #{multi_head_attention.2} parent=0
    #allocation2 [shape = 'u8[8192]{0}', space=vmem, size = 0x2000, scoped, tag = 'input window, operand 0']
    #allocation3 [shape = 's32[2]{0}', space=sflag, size = 0x8, scoped, tag = 'scoped memory for multi_head_attention.2']
    #allocation4 [shape = 'u8[16384]{0}', space=vmem, size = 0x4000, scoped, tag = 'input window, operand 1, single buffered']
    #allocation5 [shape = 's32[1]{0}', space=sflag, size = 0x4, scoped, tag = 'scoped memory for multi_head_attention.2']
    %8 = vsyncpa [#allocation3], 0
    %s9 = scalar_lea.sflag [#allocation3], 1
    %10 = vsyncpa %s9, 0
    %11 = vsyncpa [#allocation5], 0
    loop: start=0, step=1, limit=4
    $region2: #{multi_head_attention.2} parent=1 // loop_pre_header
      _
    $region3: #{multi_head_attention.2} parent=1 // loop_header
      %s13 = sphi 0, %s17
      %p14 = scmp.ge.s32.totalorder %s13, 4
      %s20 = sphi 0, %s32
      %s21 = sphi 0, %s28
      %s22 = sphi 0, %s20
      %s23 = sphi 0, %s21
      %s24 = sphi 0, %s22
      %s25 = sphi 0, %s23
      %s37 = sphi 0, %s39
      %s40 = sphi 0, %s37
      %s41 = sphi 0, %s40
      %s57 = sphi 0, %s41
      %s61 = sphi 0, %s61
      %s63 = sphi 0, %s61
      %s64 = sphi 0, %s63
      %s78 = sphi 0, %s64
      %s82 = sphi 0, %s82
      %s84 = sphi 0, %s82
      %s85 = sphi 0, %s84
      %s99 = sphi 0, %s85
      %s107 = sphi 0, %s109
      %s110 = sphi 0, %s107
      %s111 = sphi 0, %s110
      %s127 = sphi 0, %s111
    $region4: #{multi_head_attention.2} parent=1 // loop_header_branch
      %16 = sbr.rel (%p14) target = $region8
    $region5: #{multi_head_attention.2} parent=1 // loop_body
      %s18 = ssub.s32 %s13, 1
      %s19 = ssub.s32 %s13, 2
      %s26 = sadd.s32 1, %s21
      %p27 = scmp.ge.s32.totalorder %s26, 1
      %s28 = scalar_select %p27, 0, %s26
      %s29 = sadd.s32 1, %s20
      %s30 = scalar_select %p27, %s29, %s20
      %p31 = scmp.ge.s32.totalorder %s30, 2
      %s32 = scalar_select %p31, 0, %s30
      %s33 = ssub.s32 %s20, %s32
      %s34 = ssub.s32 %s21, %s28
      %s35 = sor.u32 %s33, %s34
      %p36 = scmp.eq.s32.totalorder %s35, 0
      %s38 = sadd.s32 %s37, 1
      %s39 = scalar_select %p36, %s37, %s38
      %p42 = pneg %p36
      %p43 = scmp.eq.s32.totalorder %s13, 1
      %p44 = por %p42, %p43
      %p45 = scmp.ne.s32.totalorder %s37, %s40
      %p46 = scmp.eq.s32.totalorder %s13, 0
      %p47 = por %p45, %p46
      %p48 = scmp.ne.s32.totalorder %s37, %s40
      %p49 = scmp.eq.s32.totalorder %s18, 1
      %p50 = por %p48, %p49
      %p51 = scmp.ne.s32.totalorder %s40, %s41
      %p52 = scmp.eq.s32.totalorder %s18, 0
      %p53 = por %p51, %p52
      %p54 = scmp.ne.s32.totalorder %s40, %s41
      %p55 = scmp.eq.s32.totalorder %s19, 1
      %p56 = por %p54, %p55
      %p58 = scmp.ne.s32.totalorder %s41, %s57
      %p59 = scmp.eq.s32.totalorder %s19, 0
      %p60 = por %p58, %p59
      %s62 = sadd.s32 %s61, 1
      %p65 = scmp.eq.s32.totalorder %s13, 1
      %p66 = scmp.ne.s32.totalorder %s61, %s63
      %p67 = scmp.eq.s32.totalorder %s13, 0
      %p68 = por %p66, %p67
      %p69 = scmp.ne.s32.totalorder %s61, %s63
      %p70 = scmp.eq.s32.totalorder %s18, 1
      %p71 = por %p69, %p70
      %p72 = scmp.ne.s32.totalorder %s63, %s64
      %p73 = scmp.eq.s32.totalorder %s18, 0
      %p74 = por %p72, %p73
      %p75 = scmp.ne.s32.totalorder %s63, %s64
      %p76 = scmp.eq.s32.totalorder %s19, 1
      %p77 = por %p75, %p76
      %p79 = scmp.ne.s32.totalorder %s64, %s78
      %p80 = scmp.eq.s32.totalorder %s19, 0
      %p81 = por %p79, %p80
      %s83 = sadd.s32 %s82, 1
      %p86 = scmp.eq.s32.totalorder %s13, 1
      %p87 = scmp.ne.s32.totalorder %s82, %s84
      %p88 = scmp.eq.s32.totalorder %s13, 0
      %p89 = por %p87, %p88
      %p90 = scmp.ne.s32.totalorder %s82, %s84
      %p91 = scmp.eq.s32.totalorder %s18, 1
      %p92 = por %p90, %p91
      %p93 = scmp.ne.s32.totalorder %s84, %s85
      %p94 = scmp.eq.s32.totalorder %s18, 0
      %p95 = por %p93, %p94
      %p96 = scmp.ne.s32.totalorder %s84, %s85
      %p97 = scmp.eq.s32.totalorder %s19, 1
      %p98 = por %p96, %p97
      %p100 = scmp.ne.s32.totalorder %s85, %s99
      %p101 = scmp.eq.s32.totalorder %s19, 0
      %p102 = por %p100, %p101
      %s103 = ssub.s32 %s20, %s32
      %s104 = ssub.s32 %s21, %s28
      %s105 = sor.u32 %s103, %s104
      %p106 = scmp.eq.s32.totalorder %s105, 0
      %s108 = sadd.s32 %s107, 1
      %s109 = scalar_select %p106, %s107, %s108
      %p112 = pneg %p106
      %p113 = scmp.eq.s32.totalorder %s13, 1
      %p114 = por %p112, %p113
      %p115 = scmp.ne.s32.totalorder %s107, %s110
      %p116 = scmp.eq.s32.totalorder %s13, 0
      %p117 = por %p115, %p116
      %p118 = scmp.ne.s32.totalorder %s107, %s110
      %p119 = scmp.eq.s32.totalorder %s18, 1
      %p120 = por %p118, %p119
      %p121 = scmp.ne.s32.totalorder %s110, %s111
      %p122 = scmp.eq.s32.totalorder %s18, 0
      %p123 = por %p121, %p122
      %p124 = scmp.ne.s32.totalorder %s110, %s111
      %p125 = scmp.eq.s32.totalorder %s19, 1
      %p126 = por %p124, %p125
      %p128 = scmp.ne.s32.totalorder %s111, %s127
      %p129 = scmp.eq.s32.totalorder %s19, 0
      %p130 = por %p128, %p129
      %p131 = scmp.le.s32.totalorder 1, %s13
      %p132 = scmp.lt.s32.totalorder %s13, 3
      %p133 = pnand %p131, %p132
      %p134 = pneg %p133
      // Predicated region
      $region9: #{multi_head_attention.2} parent=5 // pred_check
        _
      $region10: #{multi_head_attention.2} parent=5 // pred_check_branch
        %136 = sbr.rel (%p133) target = $region12
      $region11: #{multi_head_attention.2} parent=5 // pred_region
        %s137 = ssub.s32 %s13, 1
        // Predicated region
        $region13: #{multi_head_attention.2} parent=11 // pred_check
          %p138 = pneg %p74
        $region14: #{multi_head_attention.2} parent=11 // pred_check_branch
          %140 = sbr.rel (%p138) target = $region16
        $region15: #{multi_head_attention.2} parent=11 // pred_region
          %142 = vsyncadd [#allocation5], 0
          %s143 = sshll.u32 %s1, 4
          %s144 = int_to_ptr.hbm [resolvable:$true] %s143
          %s145 = sshll.u32 [#allocation4], 4
          %s146 = int_to_ptr.vmem [resolvable:$true] %s145
          %151 = dma.hbm_to_vmem [thread:$0]  %s144, 512, %s146, [#allocation5], 128, 128, 8
        $region16: #{multi_head_attention.2} parent=11 // pred_fallthru
          _
        // Predicated region
        $region17: #{multi_head_attention.2} parent=11 // pred_check
          %p152 = pneg %p95
        $region18: #{multi_head_attention.2} parent=11 // pred_check_branch
          %154 = sbr.rel (%p152) target = $region20
        $region19: #{multi_head_attention.2} parent=11 // pred_region
          _
        $region20: #{multi_head_attention.2} parent=11 // pred_fallthru
          _
      $region12: #{multi_head_attention.2} parent=5 // pred_fallthru
        _
      %p155 = scmp.lt.s32.totalorder %s13, 2
      // Predicated region
      $region21: #{multi_head_attention.2} parent=5 // pred_check
        %p156 = pneg %p155
      $region22: #{multi_head_attention.2} parent=5 // pred_check_branch
        %158 = sbr.rel (%p156) target = $region24
      $region23: #{multi_head_attention.2} parent=5 // pred_region
        // Predicated region
        $region25: #{multi_head_attention.2} parent=23 // pred_check
          %p159 = pneg %p47
        $region26: #{multi_head_attention.2} parent=23 // pred_check_branch
          %161 = sbr.rel (%p159) target = $region28
        $region27: #{multi_head_attention.2} parent=23 // pred_region
          %s162 = sand.u32 %s37, 1
          %s163 = scalar_lea.sflag [#allocation3], %s162
          %s164 = sand.u32 %s37, 1
          %s165 = smul.addr %s164, 8
          %s166 = scalar_lea.vmem [#allocation2], %s165
          %168 = vsyncadd %s163, 0
          %s169 = sadd.s32 %s21, %s20
          %s170 = smul.addr %s169, 8
          %s171 = scalar_lea.hbm %s0, %s170
          %s173 = sshll.u32 %s171, 4
          %s174 = int_to_ptr.hbm [resolvable:$true] %s173
          %s175 = sshll.u32 %s166, 4
          %s176 = int_to_ptr.vmem [resolvable:$true] %s175
          %178 = dma.hbm_to_vmem [thread:$0]  %s174, 128, %s176, %s163
        $region28: #{multi_head_attention.2} parent=23 // pred_fallthru
          _
      $region24: #{multi_head_attention.2} parent=5 // pred_fallthru
        _
      %p179 = scmp.le.s32.totalorder 1, %s13
      %p180 = scmp.lt.s32.totalorder %s13, 3
      %p181 = pnand %p179, %p180
      %p182 = pneg %p181
      // Predicated region
      $region29: #{multi_head_attention.2} parent=5 // pred_check
        _
      $region30: #{multi_head_attention.2} parent=5 // pred_check_branch
        %184 = sbr.rel (%p181) target = $region32
      $region31: #{multi_head_attention.2} parent=5 // pred_region
        %s185 = ssub.s32 %s13, 1
        %s186 = sand.u32 %s40, 1
        %s187 = scalar_lea.sflag [#allocation3], %s186
        %s188 = sand.u32 %s40, 1
        %s189 = smul.addr %s188, 8
        %s190 = scalar_lea.vmem [#allocation2], %s189
        // Predicated region
        $region33: #{multi_head_attention.2} parent=31 // pred_check
          %p191 = pneg %p53
        $region34: #{multi_head_attention.2} parent=31 // pred_check_branch
          %193 = sbr.rel (%p191) target = $region36
        $region35: #{multi_head_attention.2} parent=31 // pred_region
          %195 = dma.done %s187, 128
        $region36: #{multi_head_attention.2} parent=31 // pred_fallthru
          _
        // Predicated region
        $region37: #{multi_head_attention.2} parent=31 // pred_check
          %p196 = pneg %p74
        $region38: #{multi_head_attention.2} parent=31 // pred_check_branch
          %198 = sbr.rel (%p196) target = $region40
        $region39: #{multi_head_attention.2} parent=31 // pred_region
          %200 = dma.done [#allocation5], 512
        $region40: #{multi_head_attention.2} parent=31 // pred_fallthru
          _
        %s201 = sand.u32 %s40, 1
        %s202 = scalar_lea.sflag [#allocation3], %s201
        %s203 = sand.u32 %s40, 1
        %s204 = smul.addr %s203, 8
        %s205 = scalar_lea.vmem [#allocation2], %s204
        %p206 = pneg %p53
        %p207 = pneg %p50
        %p208 = pneg %p74
        %p209 = pneg %p71
        %p210 = pneg %p95
        %p211 = pneg %p92
        %p212 = pneg %p123
        %p213 = pneg %p120
        %p214 = scmp.lt.s32.totalorder %s22, 1
        %s215 = scalar_select %p214, %s22, 1
        %p216 = scmp.lt.s32.totalorder %s23, 0
        %s217 = scalar_select %p216, %s23, 0
        %s218 = sadd.s32 %s217, %s215
        %s219 = smul.addr %s218, 8
        %s220 = scalar_lea.vmem %s3, %s219
        %p221 = scmp.lt.s32.totalorder %s22, 1
        %s222 = scalar_select %p221, %s22, 1
        %p223 = scmp.lt.s32.totalorder %s23, 0
        %s224 = scalar_select %p223, %s23, 0
        %s225 = sadd.s32 %s224, %s222
        %s226 = smul.addr %s225, 8
        %s227 = scalar_lea.vmem %s3, %s226
        %v229 = vld [vmem:[%s190] sm:$0xff]
        %v230 = vpack.c.bf16 %v229, %v229
        %v231 = vld [vmem:[#allocation4] sm:$0xff]
        %v232 = vld [vmem:[#allocation4 + $0x8] sm:$0xff]
        %v233 = vld [vmem:[#allocation4 + $0x10] sm:$0xff]
        %v234 = vld [vmem:[#allocation4 + $0x18] sm:$0xff]
        %v235 = vpack.c.bf16 %v232, %v231
        %v236 = vpack.c.bf16 %v234, %v233
        %v237 = vld [vmem:[%s2] sm:$0x1]
        %v239 = vperm.slane %v237, 0
        %vm241 = vcmask 261120
        %v243 = vsel %vm241, %v230, 0
        %245 = vmatpush.bf16.msra.mxu0 0
        %246 = vmatpush.bf16.msra.mxu0 0
        %247 = vmatpush.bf16.msra.mxu0 0
        %248 = vmatpush.bf16.msra.mxu0 0
        %249 = vmatpush.bf16.msra.mxu0 0
        %250 = vmatpush.bf16.msra.mxu0 0
        %251 = vmatpush.bf16.msra.mxu0 %v236
        %252 = vmatpush.bf16.msra.mxu0 %v235
        %253 = vmatmul.bf16.gmra.mxu0 %v243
        %v254 = vpop.f32.mrf.mxu0
        %v255 = vadd.f32 %v239, %v254
        %v256 = vpop.f32.mrf.mxu0
        %257 = vdwg.mxu0
        %vm258 = vcmask 785408
        %259 = vst.msk [vmem:[%s227] sm:$0xff] %vm258, %v255
        %p260 = scmp.lt.s32.totalorder %s22, 1
        %s261 = scalar_select %p260, %s22, 1
        %p262 = scmp.lt.s32.totalorder %s23, 0
        %s263 = scalar_select %p262, %s23, 0
        %s264 = sadd.s32 %s263, %s261
        %s265 = smul.addr %s264, 8
        %s266 = scalar_lea.vmem %s3, %s265
        // Predicated region
        $region41: #{multi_head_attention.2} parent=31 // pred_check
          %p267 = pneg %p120
        $region42: #{multi_head_attention.2} parent=31 // pred_check_branch
          %269 = sbr.rel (%p267) target = $region44
        $region43: #{multi_head_attention.2} parent=31 // pred_region
          _
        $region44: #{multi_head_attention.2} parent=31 // pred_fallthru
          _
      $region32: #{multi_head_attention.2} parent=5 // pred_fallthru
        _
      %p270 = scmp.le.s32.totalorder 2, %s13
      // Predicated region
      $region45: #{multi_head_attention.2} parent=5 // pred_check
        %p271 = pneg %p270
      $region46: #{multi_head_attention.2} parent=5 // pred_check_branch
        %273 = sbr.rel (%p271) target = $region48
      $region47: #{multi_head_attention.2} parent=5 // pred_region
        %s274 = ssub.s32 %s13, 2
        // Predicated region
        $region49: #{multi_head_attention.2} parent=47 // pred_check
          %p275 = pneg %p126
        $region50: #{multi_head_attention.2} parent=47 // pred_check_branch
          %277 = sbr.rel (%p275) target = $region52
        $region51: #{multi_head_attention.2} parent=47 // pred_region
          %p278 = scmp.lt.s32.totalorder %s24, 1
          %s279 = scalar_select %p278, %s24, 1
          %p280 = scmp.lt.s32.totalorder %s25, 0
          %s281 = scalar_select %p280, %s25, 0
          %s282 = sadd.s32 %s281, %s279
          %s283 = smul.addr %s282, 8
          %s284 = scalar_lea.vmem %s3, %s283
        $region52: #{multi_head_attention.2} parent=47 // pred_fallthru
          _
      $region48: #{multi_head_attention.2} parent=5 // pred_fallthru
        _
    $region6: #{multi_head_attention.2} parent=1 // loop_footer
      %s17 = sadd.s32 1, %s13
    $region7: #{multi_head_attention.2} parent=1 // loop_footer_branch
      %12 = sbr.rel target = $region3
    $region8: #{multi_head_attention.2} parent=1 // loop_exit
      _
    %285 = vsyncpa [#allocation3], 1
    %s286 = scalar_lea.sflag [#allocation3], 1
    %287 = vsyncpa %s286, 1
    %288 = vsyncpa [#allocation5], 1

</llo_original>
